<compile_context>
chip_gen: v5e
topology: v5e:2x2
jax: 0.10.0
libtpu: 0.0.40
codegen_flags: <defaults>
</compile_context>

<pallas_src>
import functools

import jax
import jax.numpy as jnp
from jax.experimental import pallas as pl
from jax.experimental.pallas import tpu as pltpu


def _round_up(n: int, m: int) -> int:
    return ((n + m - 1) // m) * m


def mlp_kernel(x_ref, w1_ref, b1_ref, w2_ref, b2_ref, o_ref):
    # fc1: x @ W1 + b1, ReLU.  Zero-padded hidden lanes give relu(0+0)=0 and
    # therefore contribute nothing to fc2 — padding is semantics-preserving.
    h = jnp.dot(x_ref[...], w1_ref[...], preferred_element_type=jnp.float32)
    h = jnp.maximum(h + b1_ref[...], 0.0)
    # fc2: h @ W2 + b2 (output lanes beyond output_dim are zero + zero bias).
    out = jnp.dot(h, w2_ref[...], preferred_element_type=jnp.float32)
    o_ref[...] = (out + b2_ref[...]).astype(o_ref.dtype)


@functools.partial(jax.jit, static_argnames=("output_dim",))
def simple_nn_forward(x, w1, b1, w2, b2, *, output_dim):
    """x: (B, input_dim); w1: (input_dim, hidden); b1: (hidden,);
    w2: (hidden, output_dim); b2: (output_dim,) -> (B, output_dim).

    Weights are stored pre-transposed, (in_features, out_features), so the
    kernel does plain row-major MXU matmuls.
    """
    batch, input_dim = x.shape
    hidden_dim = w1.shape[1]

    # ---- lane-dense padding -------------------------------------------------
    hp = _round_up(hidden_dim, 128)      # hidden lanes -> full 128-lane vregs
    np_ = _round_up(output_dim, 128)     # output lanes -> unmasked vst

    w1p = jnp.zeros((input_dim, hp), jnp.float32).at[:, :hidden_dim].set(w1)
    b1p = jnp.zeros((1, hp), jnp.float32).at[0, :hidden_dim].set(b1)
    w2p = jnp.zeros((hp, np_), jnp.float32).at[:hidden_dim, :output_dim].set(w2)
    b2p = jnp.zeros((1, np_), jnp.float32).at[0, :output_dim].set(b2)

    # ---- batch tiling -------------------------------------------------------
    # TM: up to 128 rows per grid step (sublane-aligned), pad batch to a
    # multiple of TM so every block is full.
    tm = min(128, _round_up(batch, 8))
    bp = _round_up(batch, tm)
    xp = x if bp == batch else jnp.zeros((bp, input_dim), x.dtype).at[:batch].set(x)

    out_padded = pl.pallas_call(
        mlp_kernel,
        out_shape=jax.ShapeDtypeStruct((bp, np_), jnp.float32),
        grid_spec=pltpu.PrefetchScalarGridSpec(
            num_scalar_prefetch=0,
            grid=(bp // tm,),
            in_specs=[
                # x: one batch tile per grid step (pipelined).
                pl.BlockSpec((tm, input_dim), lambda i: (i, 0)),
                # weights / biases: constant index_map -> resident in VMEM.
                pl.BlockSpec((input_dim, hp), lambda i: (0, 0)),
                pl.BlockSpec((1, hp), lambda i: (0, 0)),
                pl.BlockSpec((hp, np_), lambda i: (0, 0)),
                pl.BlockSpec((1, np_), lambda i: (0, 0)),
            ],
            out_specs=pl.BlockSpec((tm, np_), lambda i: (i, 0)),
        ),
        compiler_params=pltpu.CompilerParams(
            # No cross-iteration carry: let Mosaic shard batch tiles across
            # TensorCores (2 TCs on v7x).
            dimension_semantics=("parallel",),
        ),
    )(xp, w1p, b1p, w2p, b2p)

    # Strip batch and lane padding.
    return out_padded[:batch, :output_dim]


def init_params(key, input_dim, hidden_dim=50, output_dim=2):
    """Deterministic init mimicking PyTorch nn.Linear (U[-1/sqrt(fan_in), +])."""
    k1, k2, k3, k4 = jax.random.split(key, 4)
    bound1 = 1.0 / jnp.sqrt(input_dim)
    bound2 = 1.0 / jnp.sqrt(hidden_dim)
    # Stored pre-transposed: (in_features, out_features).
    w1 = jax.random.uniform(k1, (input_dim, hidden_dim), jnp.float32,
                            -bound1, bound1)
    b1 = jax.random.uniform(k2, (hidden_dim,), jnp.float32, -bound1, bound1)
    w2 = jax.random.uniform(k3, (hidden_dim, output_dim), jnp.float32,
                            -bound2, bound2)
    b2 = jax.random.uniform(k4, (output_dim,), jnp.float32, -bound2, bound2)
    return w1, b1, w2, b2


if __name__ == "__main__":
    key = jax.random.PRNGKey(0)
    kx, kp = jax.random.split(key)

    batch = 8
    input_dim = 32
    hidden_dim = 50
    output_dim = 2

    x = jax.random.normal(kx, (batch, input_dim), jnp.float32)
    w1, b1, w2, b2 = init_params(kp, input_dim, hidden_dim, output_dim)

    out = simple_nn_forward(x, w1, b1, w2, b2, output_dim=output_dim)
    jax.block_until_ready(out)

    # Pure-JAX reference of the same forward pass (unpadded params).
    ref = jnp.maximum(x @ w1 + b1[None, :], 0.0) @ w2 + b2[None, :]
    assert out.shape == (batch, output_dim)
    assert jnp.allclose(out, ref, atol=1e-5, rtol=1e-5)

    print("KERNEL_OK")
</pallas_src>

<mosaic_0001>
module attributes {stable_mosaic.version = 11 : i64} {
  func.func @mlp_kernel(%arg0: i32, %arg1: memref<8x32xf32, #tpu.memory_space<vmem>>, %arg2: memref<32x128xf32, #tpu.memory_space<vmem>>, %arg3: memref<1x128xf32, #tpu.memory_space<vmem>>, %arg4: memref<128x128xf32, #tpu.memory_space<vmem>>, %arg5: memref<1x128xf32, #tpu.memory_space<vmem>>, %arg6: memref<8x128xf32, #tpu.memory_space<vmem>>) attributes {dimension_semantics = [#tpu.dimension_semantics<parallel>], iteration_bounds = array<i64: 1>, scalar_prefetch = 0 : i64, scratch_operands = 0 : i64, tpu.core_type = #tpu.core_type<tc>, window_params = [{transform_indices = @transform_0, window_bounds = array<i64: 8, 32>}, {pipeline_mode = #tpu.pipeline_mode<synchronous>, transform_indices = @transform_1, window_bounds = array<i64: 32, 128>}, {pipeline_mode = #tpu.pipeline_mode<synchronous>, transform_indices = @transform_2, window_bounds = array<i64: 1, 128>}, {pipeline_mode = #tpu.pipeline_mode<synchronous>, transform_indices = @transform_3, window_bounds = array<i64: 128, 128>}, {pipeline_mode = #tpu.pipeline_mode<synchronous>, transform_indices = @transform_4, window_bounds = array<i64: 1, 128>}, {transform_indices = @transform_5, window_bounds = array<i64: 8, 128>}]} {
    %c0 = arith.constant 0 : index
    %c0_0 = arith.constant 0 : index
    %0 = vector.load %arg1[%c0, %c0_0] : memref<8x32xf32, #tpu.memory_space<vmem>>, vector<8x32xf32>
    %c0_1 = arith.constant 0 : index
    %c0_2 = arith.constant 0 : index
    %1 = vector.load %arg2[%c0_1, %c0_2] : memref<32x128xf32, #tpu.memory_space<vmem>>, vector<32x128xf32>
    %cst = arith.constant dense<0.000000e+00> : vector<8x128xf32>
    %2 = tpu.matmul %0, %1, %cst {dimension_numbers = #tpu.dot_dimension_numbers<[1], [0], [0], [1], [0, 0, 1, 1], [], []>} : vector<8x32xf32>, vector<32x128xf32>, vector<8x128xf32> -> vector<8x128xf32>
    %c0_3 = arith.constant 0 : index
    %c0_4 = arith.constant 0 : index
    %3 = vector.load %arg3[%c0_3, %c0_4] : memref<1x128xf32, #tpu.memory_space<vmem>>, vector<1x128xf32>
    %4 = vector.broadcast %3 : vector<1x128xf32> to vector<8x128xf32>
    %5 = arith.addf %2, %4 : vector<8x128xf32>
    %cst_5 = arith.constant 0.000000e+00 : f32
    %6 = vector.broadcast %cst_5 : f32 to vector<8x128xf32>
    %7 = arith.maximumf %5, %6 : vector<8x128xf32>
    %c0_6 = arith.constant 0 : index
    %c0_7 = arith.constant 0 : index
    %8 = vector.load %arg4[%c0_6, %c0_7] : memref<128x128xf32, #tpu.memory_space<vmem>>, vector<128x128xf32>
    %cst_8 = arith.constant dense<0.000000e+00> : vector<8x128xf32>
    %9 = tpu.matmul %7, %8, %cst_8 {dimension_numbers = #tpu.dot_dimension_numbers<[1], [0], [0], [1], [0, 0, 1, 1], [], []>} : vector<8x128xf32>, vector<128x128xf32>, vector<8x128xf32> -> vector<8x128xf32>
    %c0_9 = arith.constant 0 : index
    %c0_10 = arith.constant 0 : index
    %10 = vector.load %arg5[%c0_9, %c0_10] : memref<1x128xf32, #tpu.memory_space<vmem>>, vector<1x128xf32>
    %11 = vector.broadcast %10 : vector<1x128xf32> to vector<8x128xf32>
    %12 = arith.addf %9, %11 : vector<8x128xf32>
    %c0_11 = arith.constant 0 : index
    %c0_12 = arith.constant 0 : index
    %13 = vector.load %arg6[%c0_11, %c0_12] : memref<8x128xf32, #tpu.memory_space<vmem>>, vector<8x128xf32>
    tpu.vector_store %arg6[%c0_11, %c0_12], %12 {strides = array<i32>} : memref<8x128xf32, #tpu.memory_space<vmem>>, vector<8x128xf32>,
    return
  }
  func.func @transform_0(%arg0: i32) -> (i32, i32) {
    %c0_i32 = arith.constant 0 : i32
    %c0_i32_0 = arith.constant 0 : i32
    return %arg0, %c0_i32 : i32, i32
  }
  func.func @transform_1(%arg0: i32) -> (i32, i32) {
    %c0_i32 = arith.constant 0 : i32
    %c0_i32_0 = arith.constant 0 : i32
    %c0_i32_1 = arith.constant 0 : i32
    return %c0_i32, %c0_i32_0 : i32, i32
  }
  func.func @transform_2(%arg0: i32) -> (i32, i32) {
    %c0_i32 = arith.constant 0 : i32
    %c0_i32_0 = arith.constant 0 : i32
    %c0_i32_1 = arith.constant 0 : i32
    return %c0_i32, %c0_i32_0 : i32, i32
  }
  func.func @transform_3(%arg0: i32) -> (i32, i32) {
    %c0_i32 = arith.constant 0 : i32
    %c0_i32_0 = arith.constant 0 : i32
    %c0_i32_1 = arith.constant 0 : i32
    return %c0_i32, %c0_i32_0 : i32, i32
  }
  func.func @transform_4(%arg0: i32) -> (i32, i32) {
    %c0_i32 = arith.constant 0 : i32
    %c0_i32_0 = arith.constant 0 : i32
    %c0_i32_1 = arith.constant 0 : i32
    return %c0_i32, %c0_i32_0 : i32, i32
  }
  func.func @transform_5(%arg0: i32) -> (i32, i32) {
    %c0_i32 = arith.constant 0 : i32
    %c0_i32_0 = arith.constant 0 : i32
    return %arg0, %c0_i32 : i32, i32
  }
}

</mosaic_0001>

<llo_original>
// kernel: simple_nn_forward.1
$region0: #{simple_nn_forward.1}
  #allocation0 [shape = 'u32[]', space=smem, size = 0x4, offset = 0x4, fixed_abs, tag = 'smem constant byte address 0x4 - core index']
  #allocation1 [shape = 'u32[72,128]{1,0:T(1,128)}', space=vmem, size = 0x9000, scoped, tag = 'internal scratch']
  %s0 = inlined_call_operand.vmem [shape: f32[8,32], index: 0, kind: input, shape index: {}]
  %s1 = inlined_call_operand.vmem [shape: f32[32,128], index: 1, kind: input, shape index: {}]
  %s2 = inlined_call_operand.vmem [shape: f32[1,128], index: 2, kind: input, shape index: {}]
  %s3 = inlined_call_operand.vmem [shape: f32[128,128], index: 3, kind: input, shape index: {}]
  %s4 = inlined_call_operand.vmem [shape: f32[1,128], index: 4, kind: input, shape index: {}]
  %s5 = inlined_call_operand.vmem [shape: f32[8,128], index: 5, kind: output, shape index: {}]
  %s6 = sld [smem:[#allocation0]]
  $region30: #{simple_nn_forward.1} parent=0
    _
  %s8 = ssub.s32 1, %s6
  %s9 = scalar_select 0, %s8, %s6
  // Predicated region
  $region2: #{simple_nn_forward.1} parent=0 // pred_check
    _
  $region3: #{simple_nn_forward.1} parent=0 // pred_check_branch
    %11 = sbr.rel (0) target = $region5
  $region4: #{simple_nn_forward.1} parent=0 // pred_region
    _
  $region5: #{simple_nn_forward.1} parent=0 // pred_fallthru
    _
  // Predicated region
  $region6: #{simple_nn_forward.1} parent=0 // pred_check
    _
  $region7: #{simple_nn_forward.1} parent=0 // pred_check_branch
    %13 = sbr.rel (0) target = $region9
  $region8: #{simple_nn_forward.1} parent=0 // pred_region
    _
  $region9: #{simple_nn_forward.1} parent=0 // pred_fallthru
    _
  // Predicated region
  $region10: #{simple_nn_forward.1} parent=0 // pred_check
    _
  $region11: #{simple_nn_forward.1} parent=0 // pred_check_branch
    %15 = sbr.rel (0) target = $region13
  $region12: #{simple_nn_forward.1} parent=0 // pred_region
    _
  $region13: #{simple_nn_forward.1} parent=0 // pred_fallthru
    _
  // Predicated region
  $region14: #{simple_nn_forward.1} parent=0 // pred_check
    _
  $region15: #{simple_nn_forward.1} parent=0 // pred_check_branch
    %17 = sbr.rel (0) target = $region17
  $region16: #{simple_nn_forward.1} parent=0 // pred_region
    _
  $region17: #{simple_nn_forward.1} parent=0 // pred_fallthru
    _
  // Predicated region
  $region18: #{simple_nn_forward.1} parent=0 // pred_check
    _
  $region19: #{simple_nn_forward.1} parent=0 // pred_check_branch
    %19 = sbr.rel (0) target = $region21
  $region20: #{simple_nn_forward.1} parent=0 // pred_region
    _
  $region21: #{simple_nn_forward.1} parent=0 // pred_fallthru
    _
  %v20 = vld [vmem:[%s0] sm:$0xff]
  %v21 = vld [vmem:[%s1] sm:$0xff]
  %v22 = vld [vmem:[%s1 + $0x8] sm:$0xff]
  %v23 = vld [vmem:[%s1 + $0x10] sm:$0xff]
  %v24 = vld [vmem:[%s1 + $0x18] sm:$0xff]
  %v25 = vld [vmem:[%s2] sm:$0x1]
  %v27 = vperm.slane %v25, 0
  %vm29 = vcmask 261120
  %v31 = vsel %vm29, %v20, 0
  %33 = vmatpush.msra.mxu0 0.0
  %34 = vmatpush.msra.mxu0 0.0
  %35 = vmatpush.msra.mxu0 0.0
  %36 = vmatpush.msra.mxu0 0.0
  %37 = vmatpush.msra.mxu0 0.0
  %38 = vmatpush.msra.mxu0 0.0
  %39 = vmatpush.msra.mxu0 0.0
  %40 = vmatpush.msra.mxu0 0.0
  %41 = vmatpush.msra.mxu0 0.0
  %42 = vmatpush.msra.mxu0 0.0
  %43 = vmatpush.msra.mxu0 0.0
  %44 = vmatpush.msra.mxu0 0.0
  %45 = vmatpush.msra.mxu0 %v24
  %46 = vmatpush.msra.mxu0 %v23
  %47 = vmatpush.msra.mxu0 %v22
  %48 = vmatpush.msra.mxu0 %v21
  %49 = vmatmul.f32.gmra.mxu0 %v31
  %v50 = vpop.f32.mrf.mxu0
  %v51 = vadd.f32 %v27, %v50
  %52 = vdwg.mxu0
  %v53 = vmax.f32 %v51, 0.0
  %v54 = vld [vmem:[%s3] sm:$0xff]
  %v55 = vld [vmem:[%s3 + $0x8] sm:$0xff]
  %v56 = vld [vmem:[%s3 + $0x10] sm:$0xff]
  %v57 = vld [vmem:[%s3 + $0x18] sm:$0xff]
  %v58 = vld [vmem:[%s3 + $0x20] sm:$0xff]
  %v59 = vld [vmem:[%s3 + $0x28] sm:$0xff]
  %v60 = vld [vmem:[%s3 + $0x30] sm:$0xff]
  %v61 = vld [vmem:[%s3 + $0x38] sm:$0xff]
  %v62 = vld [vmem:[%s3 + $0x40] sm:$0xff]
  %v63 = vld [vmem:[%s3 + $0x48] sm:$0xff]
  %v64 = vld [vmem:[%s3 + $0x50] sm:$0xff]
  %v65 = vld [vmem:[%s3 + $0x58] sm:$0xff]
  %v66 = vld [vmem:[%s3 + $0x60] sm:$0xff]
  %v67 = vld [vmem:[%s3 + $0x68] sm:$0xff]
  %v68 = vld [vmem:[%s3 + $0x70] sm:$0xff]
  %v69 = vld [vmem:[%s3 + $0x78] sm:$0xff]
  %v70 = vld [vmem:[%s4] sm:$0x1]
  %v72 = vperm.slane %v70, 0
  %74 = vmatpush.msra.mxu0 %v69
  %75 = vmatpush.msra.mxu0 %v68
  %76 = vmatpush.msra.mxu0 %v67
  %77 = vmatpush.msra.mxu0 %v66
  %78 = vmatpush.msra.mxu0 %v65
  %79 = vmatpush.msra.mxu0 %v64
  %80 = vmatpush.msra.mxu0 %v63
  %81 = vmatpush.msra.mxu0 %v62
  %82 = vmatpush.msra.mxu0 %v61
  %83 = vmatpush.msra.mxu0 %v60
  %84 = vmatpush.msra.mxu0 %v59
  %85 = vmatpush.msra.mxu0 %v58
  %86 = vmatpush.msra.mxu0 %v57
  %87 = vmatpush.msra.mxu0 %v56
  %88 = vmatpush.msra.mxu0 %v55
  %89 = vmatpush.msra.mxu0 %v54
  %90 = vmatmul.f32.gmra.mxu0 %v53
  %v91 = vpop.f32.mrf.mxu0
  %v92 = vadd.f32 %v72, %v91
  %93 = vdwg.mxu0
  %94 = vst [vmem:[%s5] sm:$0xff] %v92
  // Predicated region
  $region22: #{simple_nn_forward.1} parent=0 // pred_check
    _
  $region23: #{simple_nn_forward.1} parent=0 // pred_check_branch
    %96 = sbr.rel (0) target = $region25
  $region24: #{simple_nn_forward.1} parent=0 // pred_region
    _
  $region25: #{simple_nn_forward.1} parent=0 // pred_fallthru
    _
  // Predicated region
  $region26: #{simple_nn_forward.1} parent=0 // pred_check
    _
  $region27: #{simple_nn_forward.1} parent=0 // pred_check_branch
    %98 = sbr.rel (0) target = $region29
  $region28: #{simple_nn_forward.1} parent=0 // pred_region
    _
  $region29: #{simple_nn_forward.1} parent=0 // pred_fallthru
    _

</llo_original>
